<compile_context>
chip_gen: v5e
topology: v5e:2x2
jax: 0.10.0
libtpu: 0.0.40
codegen_flags: <defaults>
</compile_context>

<pallas_src>
import jax
import jax.numpy as jnp
from jax.experimental import pallas as pl
from jax.experimental.pallas import tpu as pltpu


# ----------------------------------------------------------------------------
# Fused forward kernel
# ----------------------------------------------------------------------------
def _gin_forward_kernel(
    x_ref, adj_ref, pool_ref, bias_ref,
    c1_w1, c1_w2, c2_w1, c2_w2, c3_w1, c3_w2,
    l1_wa, l1_wb, l1_wc, l2_w,
    out_ref,
):
    x = x_ref[...]            # [N, F_in]  f32
    adj = adj_ref[...]        # [N, N]     bf16, adj[i, j] = mult(j->i) + (1+eps)*[i==j]
    pool = pool_ref[...]      # [G, N]     bf16 0/1 sum-pool matrix
    biases = bias_ref[...]    # [8, dim_h] f32 packed biases

    b = lambda i: biases[i:i + 1, :]            # [1, dim_h]
    nc = out_ref.shape[-1]

    def gin_conv(h, w1, b1, w2, b2):
        # Aggregation (self term already folded into adj): bf16 MXU, f32 acc.
        z = jnp.dot(adj, h.astype(jnp.bfloat16),
                    preferred_element_type=jnp.float32)
        # Linear -> (folded BatchNorm, eval) -> ReLU
        z = jnp.maximum(
            jnp.dot(z, w1[...], preferred_element_type=jnp.float32) + b1, 0.0)
        # Linear -> ReLU
        z = jnp.maximum(
            jnp.dot(z, w2[...], preferred_element_type=jnp.float32) + b2, 0.0)
        return z

    def add_pool(h):
        return jnp.dot(pool, h.astype(jnp.bfloat16),
                       preferred_element_type=jnp.float32)    # [G, dim_h]

    # Conv layers with pooling interleaved (shortens h_k live ranges).
    h1 = gin_conv(x,  c1_w1, b(0), c1_w2, b(1))   # [N, dim_h]
    p1 = add_pool(h1)
    h2 = gin_conv(h1, c2_w1, b(2), c2_w2, b(3))
    p2 = add_pool(h2)
    h3 = gin_conv(h2, c3_w1, b(4), c3_w2, b(5))
    p3 = add_pool(h3)

    # lin1(concat([p1,p2,p3])) == p1 @ W[0:H] + p2 @ W[H:2H] + p3 @ W[2H:3H]
    h = (jnp.dot(p1, l1_wa[...], preferred_element_type=jnp.float32)
         + jnp.dot(p2, l1_wb[...], preferred_element_type=jnp.float32)
         + jnp.dot(p3, l1_wc[...], preferred_element_type=jnp.float32)
         + b(6))
    h = jnp.maximum(h, 0.0)
    # TODO(synk): F.dropout(p=0.5) is training-only; identity at eval time.

    logits = (jnp.dot(h, l2_w[...], preferred_element_type=jnp.float32)
              + biases[7:8, :nc])

    # log_softmax over dim=1 (f32)
    m = jnp.max(logits, axis=-1, keepdims=True)
    s = logits - m
    lse = jnp.log(jnp.sum(jnp.exp(s), axis=-1, keepdims=True))
    out_ref[...] = s - lse


# ----------------------------------------------------------------------------
# Wrapper
# ----------------------------------------------------------------------------
def _vmem_limit_bytes():
    """Generation-aware VMEM request: leave headroom on v7x's 64 MiB/TC."""
    cap = 128 * 1024 * 1024
    try:
        cap = getattr(pltpu.get_tpu_info(), "vmem_capacity_bytes", cap)
    except Exception:
        pass
    return min(int(0.75 * cap), 64 * 1024 * 1024)


def _cost_estimate(x, adj, pool, params):
    n, f_in = x.shape
    g = pool.shape[0]
    dim_h = params["weights"][0].shape[1]
    nc = params["weights"][-1].shape[1]
    flops = 0
    flops += 2 * n * n * f_in + 2 * n * f_in * dim_h + 2 * n * dim_h * dim_h   # conv1
    flops += 2 * (2 * n * n * dim_h + 4 * n * dim_h * dim_h)                   # conv2/3
    flops += 3 * 2 * g * n * dim_h                                             # pooling
    flops += 3 * 2 * g * dim_h * dim_h + 2 * g * dim_h * nc                    # head
    args = (x, adj, pool, params["biases"], *params["weights"])
    bytes_accessed = sum(int(a.size) * a.dtype.itemsize for a in args) + g * nc * 4
    return pl.CostEstimate(flops=flops, transcendentals=g * (nc + 1),
                           bytes_accessed=bytes_accessed)


def gin_forward(params, x, adj, pool):
    g = pool.shape[0]
    num_classes = params["weights"][-1].shape[1]
    args = (x, adj, pool, params["biases"], *params["weights"])
    vmem = pl.BlockSpec(memory_space=pltpu.MemorySpace.VMEM)
    return pl.pallas_call(
        _gin_forward_kernel,
        out_shape=jax.ShapeDtypeStruct((g, num_classes), jnp.float32),
        in_specs=[vmem] * len(args),
        out_specs=vmem,
        compiler_params=pltpu.CompilerParams(vmem_limit_bytes=_vmem_limit_bytes()),
        cost_estimate=_cost_estimate(x, adj, pool, params),
    )(*args)


# ----------------------------------------------------------------------------
# Plain-JAX parameter construction (deterministic, synthetic) + BN folding
# ----------------------------------------------------------------------------
def _fold_batchnorm(w, b, gamma, beta, mean, var, eps=1e-5):
    """Fold eval-mode BatchNorm1d into the preceding Linear (y = xW + b)."""
    scale = gamma / jnp.sqrt(var + eps)
    return w * scale[None, :], (b - mean) * scale + beta


def _make_conv(key, in_dim, dim_h):
    k1, k2 = jax.random.split(key, 2)
    w1 = jax.random.normal(k1, (in_dim, dim_h), jnp.float32) / jnp.sqrt(float(in_dim))
    b1 = jnp.zeros((dim_h,), jnp.float32)
    w2 = jax.random.normal(k2, (dim_h, dim_h), jnp.float32) / jnp.sqrt(float(dim_h))
    b2 = jnp.zeros((dim_h,), jnp.float32)
    # BatchNorm1d defaults (untrained): gamma=1, beta=0, mean=0, var=1
    gamma = jnp.ones((dim_h,), jnp.float32)
    beta = jnp.zeros((dim_h,), jnp.float32)
    mean = jnp.zeros((dim_h,), jnp.float32)
    var = jnp.ones((dim_h,), jnp.float32)
    w1f, b1f = _fold_batchnorm(w1, b1, gamma, beta, mean, var)
    return (w1f, w2), (b1f, b2)


def make_params(key, input_dim, dim_h, num_classes=2):
    k1, k2, k3, k4, k5 = jax.random.split(key, 5)
    (c1w, c1b) = _make_conv(k1, input_dim, dim_h)
    (c2w, c2b) = _make_conv(k2, dim_h, dim_h)
    (c3w, c3b) = _make_conv(k3, dim_h, dim_h)

    lin1_w = jax.random.normal(k4, (dim_h * 3, dim_h), jnp.float32) / jnp.sqrt(3.0 * dim_h)
    lin1_b = jnp.zeros((dim_h,), jnp.float32)
    lin2_w = jax.random.normal(k5, (dim_h, num_classes), jnp.float32) / jnp.sqrt(float(dim_h))
    lin2_b = jnp.zeros((num_classes,), jnp.float32)

    # Pack all small bias vectors into one (8, dim_h) slab -> 1 DMA instead of 8.
    lin2_b_pad = jnp.zeros((dim_h,), jnp.float32).at[:num_classes].set(lin2_b)
    biases = jnp.stack([c1b[0], c1b[1], c2b[0], c2b[1], c3b[0], c3b[1],
                        lin1_b, lin2_b_pad], axis=0)          # [8, dim_h]

    weights = (c1w[0], c1w[1], c2w[0], c2w[1], c3w[0], c3w[1],
               # lin1's weight split into the three per-layer row blocks
               lin1_w[0:dim_h], lin1_w[dim_h:2 * dim_h], lin1_w[2 * dim_h:3 * dim_h],
               lin2_w)
    return {"weights": weights, "biases": biases}


# ----------------------------------------------------------------------------
# Demo
# ----------------------------------------------------------------------------
if __name__ == "__main__":
    key = jax.random.PRNGKey(0)
    input_dim = 16          # node-feature dim (GIN(input_dim))
    dim_h = 64              # hidden dim (GIN default dim_h=64)
    num_nodes = 32
    num_graphs = 2
    nodes_per_graph = num_nodes // num_graphs
    edges_per_graph = 48
    eps = 0.0               # GINConv default

    (k_x, k_src0, k_dst0, k_src1, k_dst1, k_params) = jax.random.split(key, 6)

    # node features
    x = jax.random.normal(k_x, (num_nodes, input_dim), jnp.float32)

    # random intra-graph edges (edge_index: row 0 = src, row 1 = dst)
    src0 = jax.random.randint(k_src0, (edges_per_graph,), 0, nodes_per_graph)
    dst0 = jax.random.randint(k_dst0, (edges_per_graph,), 0, nodes_per_graph)
    src1 = jax.random.randint(k_src1, (edges_per_graph,), 0, nodes_per_graph) + nodes_per_graph
    dst1 = jax.random.randint(k_dst1, (edges_per_graph,), 0, nodes_per_graph) + nodes_per_graph
    edge_index = jnp.stack([jnp.concatenate([src0, src1]),
                            jnp.concatenate([dst0, dst1])])          # [2, 96]

    # batch assignment
    batch = jnp.concatenate([jnp.zeros((nodes_per_graph,), jnp.int32),
                             jnp.ones((nodes_per_graph,), jnp.int32)])

    # dense adjacency: adj[dst, src] += 1 (counts duplicate-edge multiplicity,
    # matching PyG sum aggregation), with the (1+eps)*x self term folded in as
    # an identity diagonal. Stored as bf16 (small-integer values are exact).
    adj = jnp.zeros((num_nodes, num_nodes), jnp.float32)
    adj = adj.at[edge_index[1], edge_index[0]].add(1.0)
    adj = adj + (1.0 + eps) * jnp.eye(num_nodes, dtype=jnp.float32)
    adj = adj.astype(jnp.bfloat16)

    # sum-pool matrix [G, N] for global_add_pool (0/1, exact in bf16)
    pool = (batch[None, :] == jnp.arange(num_graphs)[:, None]).astype(jnp.bfloat16)

    params = make_params(k_params, input_dim, dim_h, num_classes=2)

    out = jax.jit(gin_forward)(params, x, adj, pool)
    jax.block_until_ready(out)
    assert out.shape == (num_graphs, 2) and out.dtype == jnp.float32
    assert bool(jnp.all(jnp.isfinite(out)))
    # log_softmax rows must sum (in prob space) to ~1
    assert bool(jnp.allclose(jnp.sum(jnp.exp(out), axis=1), 1.0, atol=1e-5))
    print("KERNEL_OK")
</pallas_src>

<mosaic_0001>
module attributes {stable_mosaic.version = 11 : i64} {
  func.func @_gin_forward_kernel(%arg0: memref<32x16xf32, #tpu.memory_space<vmem>>, %arg1: memref<32x32xbf16, #tpu.memory_space<vmem>>, %arg2: memref<2x32xbf16, #tpu.memory_space<vmem>>, %arg3: memref<8x64xf32, #tpu.memory_space<vmem>>, %arg4: memref<16x64xf32, #tpu.memory_space<vmem>>, %arg5: memref<64x64xf32, #tpu.memory_space<vmem>>, %arg6: memref<64x64xf32, #tpu.memory_space<vmem>>, %arg7: memref<64x64xf32, #tpu.memory_space<vmem>>, %arg8: memref<64x64xf32, #tpu.memory_space<vmem>>, %arg9: memref<64x64xf32, #tpu.memory_space<vmem>>, %arg10: memref<64x64xf32, #tpu.memory_space<vmem>>, %arg11: memref<64x64xf32, #tpu.memory_space<vmem>>, %arg12: memref<64x64xf32, #tpu.memory_space<vmem>>, %arg13: memref<64x2xf32, #tpu.memory_space<vmem>>, %arg14: memref<2x2xf32, #tpu.memory_space<vmem>>) attributes {dimension_semantics = [], scalar_prefetch = 0 : i64, scratch_operands = 0 : i64, tpu.core_type = #tpu.core_type<tc>} {
    %c0 = arith.constant 0 : index
    %c0_0 = arith.constant 0 : index
    %0 = vector.load %arg0[%c0, %c0_0] : memref<32x16xf32, #tpu.memory_space<vmem>>, vector<32x16xf32>
    %c0_1 = arith.constant 0 : index
    %c0_2 = arith.constant 0 : index
    %1 = vector.load %arg1[%c0_1, %c0_2] : memref<32x32xbf16, #tpu.memory_space<vmem>>, vector<32x32xbf16>
    %c0_3 = arith.constant 0 : index
    %c0_4 = arith.constant 0 : index
    %2 = vector.load %arg2[%c0_3, %c0_4] : memref<2x32xbf16, #tpu.memory_space<vmem>>, vector<2x32xbf16>
    %c0_5 = arith.constant 0 : index
    %c0_6 = arith.constant 0 : index
    %3 = vector.load %arg3[%c0_5, %c0_6] : memref<8x64xf32, #tpu.memory_space<vmem>>, vector<8x64xf32>
    %4 = vector.extract_strided_slice %3 {offsets = [0, 0], sizes = [1, 64], strides = [1, 1]} : vector<8x64xf32> to vector<1x64xf32>
    %5 = vector.extract_strided_slice %3 {offsets = [1, 0], sizes = [1, 64], strides = [1, 1]} : vector<8x64xf32> to vector<1x64xf32>
    %6 = arith.truncf %0 : vector<32x16xf32> to vector<32x16xbf16>
    %cst = arith.constant dense<0.000000e+00> : vector<32x16xf32>
    %7 = tpu.matmul %1, %6, %cst {dimension_numbers = #tpu.dot_dimension_numbers<[1], [0], [0], [1], [0, 0, 1, 1], [], []>} : vector<32x32xbf16>, vector<32x16xbf16>, vector<32x16xf32> -> vector<32x16xf32>
    %c0_7 = arith.constant 0 : index
    %c0_8 = arith.constant 0 : index
    %8 = vector.load %arg4[%c0_7, %c0_8] : memref<16x64xf32, #tpu.memory_space<vmem>>, vector<16x64xf32>
    %cst_9 = arith.constant dense<0.000000e+00> : vector<32x64xf32>
    %9 = tpu.matmul %7, %8, %cst_9 {dimension_numbers = #tpu.dot_dimension_numbers<[1], [0], [0], [1], [0, 0, 1, 1], [], []>} : vector<32x16xf32>, vector<16x64xf32>, vector<32x64xf32> -> vector<32x64xf32>
    %10 = vector.broadcast %4 : vector<1x64xf32> to vector<32x64xf32>
    %11 = arith.addf %9, %10 : vector<32x64xf32>
    %cst_10 = arith.constant 0.000000e+00 : f32
    %12 = vector.broadcast %cst_10 : f32 to vector<32x64xf32>
    %13 = arith.maximumf %11, %12 : vector<32x64xf32>
    %c0_11 = arith.constant 0 : index
    %c0_12 = arith.constant 0 : index
    %14 = vector.load %arg5[%c0_11, %c0_12] : memref<64x64xf32, #tpu.memory_space<vmem>>, vector<64x64xf32>
    %cst_13 = arith.constant dense<0.000000e+00> : vector<32x64xf32>
    %15 = tpu.matmul %13, %14, %cst_13 {dimension_numbers = #tpu.dot_dimension_numbers<[1], [0], [0], [1], [0, 0, 1, 1], [], []>} : vector<32x64xf32>, vector<64x64xf32>, vector<32x64xf32> -> vector<32x64xf32>
    %16 = vector.broadcast %5 : vector<1x64xf32> to vector<32x64xf32>
    %17 = arith.addf %15, %16 : vector<32x64xf32>
    %cst_14 = arith.constant 0.000000e+00 : f32
    %18 = vector.broadcast %cst_14 : f32 to vector<32x64xf32>
    %19 = arith.maximumf %17, %18 : vector<32x64xf32>
    %20 = arith.truncf %19 : vector<32x64xf32> to vector<32x64xbf16>
    %cst_15 = arith.constant dense<0.000000e+00> : vector<2x64xf32>
    %21 = tpu.matmul %2, %20, %cst_15 {dimension_numbers = #tpu.dot_dimension_numbers<[1], [0], [0], [1], [0, 0, 1, 1], [], []>} : vector<2x32xbf16>, vector<32x64xbf16>, vector<2x64xf32> -> vector<2x64xf32>
    %22 = vector.extract_strided_slice %3 {offsets = [2, 0], sizes = [1, 64], strides = [1, 1]} : vector<8x64xf32> to vector<1x64xf32>
    %23 = vector.extract_strided_slice %3 {offsets = [3, 0], sizes = [1, 64], strides = [1, 1]} : vector<8x64xf32> to vector<1x64xf32>
    %24 = arith.truncf %19 : vector<32x64xf32> to vector<32x64xbf16>
    %cst_16 = arith.constant dense<0.000000e+00> : vector<32x64xf32>
    %25 = tpu.matmul %1, %24, %cst_16 {dimension_numbers = #tpu.dot_dimension_numbers<[1], [0], [0], [1], [0, 0, 1, 1], [], []>} : vector<32x32xbf16>, vector<32x64xbf16>, vector<32x64xf32> -> vector<32x64xf32>
    %c0_17 = arith.constant 0 : index
    %c0_18 = arith.constant 0 : index
    %26 = vector.load %arg6[%c0_17, %c0_18] : memref<64x64xf32, #tpu.memory_space<vmem>>, vector<64x64xf32>
    %cst_19 = arith.constant dense<0.000000e+00> : vector<32x64xf32>
    %27 = tpu.matmul %25, %26, %cst_19 {dimension_numbers = #tpu.dot_dimension_numbers<[1], [0], [0], [1], [0, 0, 1, 1], [], []>} : vector<32x64xf32>, vector<64x64xf32>, vector<32x64xf32> -> vector<32x64xf32>
    %28 = vector.broadcast %22 : vector<1x64xf32> to vector<32x64xf32>
    %29 = arith.addf %27, %28 : vector<32x64xf32>
    %cst_20 = arith.constant 0.000000e+00 : f32
    %30 = vector.broadcast %cst_20 : f32 to vector<32x64xf32>
    %31 = arith.maximumf %29, %30 : vector<32x64xf32>
    %c0_21 = arith.constant 0 : index
    %c0_22 = arith.constant 0 : index
    %32 = vector.load %arg7[%c0_21, %c0_22] : memref<64x64xf32, #tpu.memory_space<vmem>>, vector<64x64xf32>
    %cst_23 = arith.constant dense<0.000000e+00> : vector<32x64xf32>
    %33 = tpu.matmul %31, %32, %cst_23 {dimension_numbers = #tpu.dot_dimension_numbers<[1], [0], [0], [1], [0, 0, 1, 1], [], []>} : vector<32x64xf32>, vector<64x64xf32>, vector<32x64xf32> -> vector<32x64xf32>
    %34 = vector.broadcast %23 : vector<1x64xf32> to vector<32x64xf32>
    %35 = arith.addf %33, %34 : vector<32x64xf32>
    %cst_24 = arith.constant 0.000000e+00 : f32
    %36 = vector.broadcast %cst_24 : f32 to vector<32x64xf32>
    %37 = arith.maximumf %35, %36 : vector<32x64xf32>
    %38 = arith.truncf %37 : vector<32x64xf32> to vector<32x64xbf16>
    %cst_25 = arith.constant dense<0.000000e+00> : vector<2x64xf32>
    %39 = tpu.matmul %2, %38, %cst_25 {dimension_numbers = #tpu.dot_dimension_numbers<[1], [0], [0], [1], [0, 0, 1, 1], [], []>} : vector<2x32xbf16>, vector<32x64xbf16>, vector<2x64xf32> -> vector<2x64xf32>
    %40 = vector.extract_strided_slice %3 {offsets = [4, 0], sizes = [1, 64], strides = [1, 1]} : vector<8x64xf32> to vector<1x64xf32>
    %41 = vector.extract_strided_slice %3 {offsets = [5, 0], sizes = [1, 64], strides = [1, 1]} : vector<8x64xf32> to vector<1x64xf32>
    %42 = arith.truncf %37 : vector<32x64xf32> to vector<32x64xbf16>
    %cst_26 = arith.constant dense<0.000000e+00> : vector<32x64xf32>
    %43 = tpu.matmul %1, %42, %cst_26 {dimension_numbers = #tpu.dot_dimension_numbers<[1], [0], [0], [1], [0, 0, 1, 1], [], []>} : vector<32x32xbf16>, vector<32x64xbf16>, vector<32x64xf32> -> vector<32x64xf32>
    %c0_27 = arith.constant 0 : index
    %c0_28 = arith.constant 0 : index
    %44 = vector.load %arg8[%c0_27, %c0_28] : memref<64x64xf32, #tpu.memory_space<vmem>>, vector<64x64xf32>
    %cst_29 = arith.constant dense<0.000000e+00> : vector<32x64xf32>
    %45 = tpu.matmul %43, %44, %cst_29 {dimension_numbers = #tpu.dot_dimension_numbers<[1], [0], [0], [1], [0, 0, 1, 1], [], []>} : vector<32x64xf32>, vector<64x64xf32>, vector<32x64xf32> -> vector<32x64xf32>
    %46 = vector.broadcast %40 : vector<1x64xf32> to vector<32x64xf32>
    %47 = arith.addf %45, %46 : vector<32x64xf32>
    %cst_30 = arith.constant 0.000000e+00 : f32
    %48 = vector.broadcast %cst_30 : f32 to vector<32x64xf32>
    %49 = arith.maximumf %47, %48 : vector<32x64xf32>
    %c0_31 = arith.constant 0 : index
    %c0_32 = arith.constant 0 : index
    %50 = vector.load %arg9[%c0_31, %c0_32] : memref<64x64xf32, #tpu.memory_space<vmem>>, vector<64x64xf32>
    %cst_33 = arith.constant dense<0.000000e+00> : vector<32x64xf32>
    %51 = tpu.matmul %49, %50, %cst_33 {dimension_numbers = #tpu.dot_dimension_numbers<[1], [0], [0], [1], [0, 0, 1, 1], [], []>} : vector<32x64xf32>, vector<64x64xf32>, vector<32x64xf32> -> vector<32x64xf32>
    %52 = vector.broadcast %41 : vector<1x64xf32> to vector<32x64xf32>
    %53 = arith.addf %51, %52 : vector<32x64xf32>
    %cst_34 = arith.constant 0.000000e+00 : f32
    %54 = vector.broadcast %cst_34 : f32 to vector<32x64xf32>
    %55 = arith.maximumf %53, %54 : vector<32x64xf32>
    %56 = arith.truncf %55 : vector<32x64xf32> to vector<32x64xbf16>
    %cst_35 = arith.constant dense<0.000000e+00> : vector<2x64xf32>
    %57 = tpu.matmul %2, %56, %cst_35 {dimension_numbers = #tpu.dot_dimension_numbers<[1], [0], [0], [1], [0, 0, 1, 1], [], []>} : vector<2x32xbf16>, vector<32x64xbf16>, vector<2x64xf32> -> vector<2x64xf32>
    %c0_36 = arith.constant 0 : index
    %c0_37 = arith.constant 0 : index
    %58 = vector.load %arg10[%c0_36, %c0_37] : memref<64x64xf32, #tpu.memory_space<vmem>>, vector<64x64xf32>
    %cst_38 = arith.constant dense<0.000000e+00> : vector<2x64xf32>
    %59 = tpu.matmul %21, %58, %cst_38 {dimension_numbers = #tpu.dot_dimension_numbers<[1], [0], [0], [1], [0, 0, 1, 1], [], []>} : vector<2x64xf32>, vector<64x64xf32>, vector<2x64xf32> -> vector<2x64xf32>
    %c0_39 = arith.constant 0 : index
    %c0_40 = arith.constant 0 : index
    %60 = vector.load %arg11[%c0_39, %c0_40] : memref<64x64xf32, #tpu.memory_space<vmem>>, vector<64x64xf32>
    %cst_41 = arith.constant dense<0.000000e+00> : vector<2x64xf32>
    %61 = tpu.matmul %39, %60, %cst_41 {dimension_numbers = #tpu.dot_dimension_numbers<[1], [0], [0], [1], [0, 0, 1, 1], [], []>} : vector<2x64xf32>, vector<64x64xf32>, vector<2x64xf32> -> vector<2x64xf32>
    %62 = arith.addf %59, %61 : vector<2x64xf32>
    %c0_42 = arith.constant 0 : index
    %c0_43 = arith.constant 0 : index
    %63 = vector.load %arg12[%c0_42, %c0_43] : memref<64x64xf32, #tpu.memory_space<vmem>>, vector<64x64xf32>
    %cst_44 = arith.constant dense<0.000000e+00> : vector<2x64xf32>
    %64 = tpu.matmul %57, %63, %cst_44 {dimension_numbers = #tpu.dot_dimension_numbers<[1], [0], [0], [1], [0, 0, 1, 1], [], []>} : vector<2x64xf32>, vector<64x64xf32>, vector<2x64xf32> -> vector<2x64xf32>
    %65 = arith.addf %62, %64 : vector<2x64xf32>
    %66 = vector.extract_strided_slice %3 {offsets = [6, 0], sizes = [1, 64], strides = [1, 1]} : vector<8x64xf32> to vector<1x64xf32>
    %67 = vector.broadcast %66 : vector<1x64xf32> to vector<2x64xf32>
    %68 = arith.addf %65, %67 : vector<2x64xf32>
    %cst_45 = arith.constant 0.000000e+00 : f32
    %69 = vector.broadcast %cst_45 : f32 to vector<2x64xf32>
    %70 = arith.maximumf %68, %69 : vector<2x64xf32>
    %c0_46 = arith.constant 0 : index
    %c0_47 = arith.constant 0 : index
    %71 = vector.load %arg13[%c0_46, %c0_47] : memref<64x2xf32, #tpu.memory_space<vmem>>, vector<64x2xf32>
    %cst_48 = arith.constant dense<0.000000e+00> : vector<2x2xf32>
    %72 = tpu.matmul %70, %71, %cst_48 {dimension_numbers = #tpu.dot_dimension_numbers<[1], [0], [0], [1], [0, 0, 1, 1], [], []>} : vector<2x64xf32>, vector<64x2xf32>, vector<2x2xf32> -> vector<2x2xf32>
    %73 = vector.extract_strided_slice %3 {offsets = [7, 0], sizes = [1, 2], strides = [1, 1]} : vector<8x64xf32> to vector<1x2xf32>
    %74 = vector.broadcast %73 : vector<1x2xf32> to vector<2x2xf32>
    %75 = arith.addf %72, %74 : vector<2x2xf32>
    %cst_49 = arith.constant dense<0xFF800000> : vector<2xf32>
    %76 = vector.multi_reduction <maximumf>, %75, %cst_49 [1] : vector<2x2xf32> to vector<2xf32>
    %77 = vector.shape_cast %76 : vector<2xf32> to vector<2x1xf32>
    %78 = vector.broadcast %77 : vector<2x1xf32> to vector<2x2xf32>
    %79 = arith.subf %75, %78 : vector<2x2xf32>
    %80 = math.exp %79 : vector<2x2xf32>
    %cst_50 = arith.constant dense<0.000000e+00> : vector<2xf32>
    %81 = vector.multi_reduction <add>, %80, %cst_50 [1] : vector<2x2xf32> to vector<2xf32>
    %82 = vector.shape_cast %81 : vector<2xf32> to vector<2x1xf32>
    %83 = math.log %82 : vector<2x1xf32>
    %84 = vector.broadcast %83 : vector<2x1xf32> to vector<2x2xf32>
    %85 = arith.subf %79, %84 : vector<2x2xf32>
    %c0_51 = arith.constant 0 : index
    %c0_52 = arith.constant 0 : index
    %86 = vector.load %arg14[%c0_51, %c0_52] : memref<2x2xf32, #tpu.memory_space<vmem>>, vector<2x2xf32>
    tpu.vector_store %arg14[%c0_51, %c0_52], %85 {strides = array<i32>} : memref<2x2xf32, #tpu.memory_space<vmem>>, vector<2x2xf32>,
    return
  }
}

</mosaic_0001>

<llo_original>
// kernel: gin_forward.1
$region0: #{gin_forward.1}
  #allocation0 [shape = 'u32[]', space=smem, size = 0x4, offset = 0x4, fixed_abs, tag = 'smem constant byte address 0x4 - core index']
  #allocation1 [shape = 'u32[72,128]{1,0:T(1,128)}', space=vmem, size = 0x9000, scoped, tag = 'internal scratch']
  %s0 = inlined_call_operand.vmem [shape: f32[32,16], index: 0, kind: input, shape index: {}]
  %s1 = inlined_call_operand.vmem [shape: bf16[32,32], index: 1, kind: input, shape index: {}]
  %s2 = inlined_call_operand.vmem [shape: bf16[2,32], index: 2, kind: input, shape index: {}]
  %s3 = inlined_call_operand.vmem [shape: f32[8,64], index: 3, kind: input, shape index: {}]
  %s4 = inlined_call_operand.vmem [shape: f32[16,64], index: 4, kind: input, shape index: {}]
  %s5 = inlined_call_operand.vmem [shape: f32[64,64], index: 5, kind: input, shape index: {}]
  %s6 = inlined_call_operand.hbm [shape: f32[64,64], index: 6, kind: input, shape index: {}]
  %s7 = inlined_call_operand.hbm [shape: f32[64,64], index: 7, kind: input, shape index: {}]
  %s8 = inlined_call_operand.hbm [shape: f32[64,64], index: 8, kind: input, shape index: {}]
  %s9 = inlined_call_operand.hbm [shape: f32[64,64], index: 9, kind: input, shape index: {}]
  %s10 = inlined_call_operand.hbm [shape: f32[64,64], index: 10, kind: input, shape index: {}]
  %s11 = inlined_call_operand.hbm [shape: f32[64,64], index: 11, kind: input, shape index: {}]
  %s12 = inlined_call_operand.hbm [shape: f32[64,64], index: 12, kind: input, shape index: {}]
  %s13 = inlined_call_operand.vmem [shape: f32[64,2], index: 13, kind: input, shape index: {}]
  %s14 = inlined_call_operand.hbm [shape: f32[2,2], index: 14, kind: output, shape index: {}]
  %s15 = sld [smem:[#allocation0]]
  $region94: #{gin_forward.1} parent=0
    _
  %s17 = ssub.s32 1, %s15
  %s18 = scalar_select 0, %s17, %s15
  $region1: #{gin_forward.1} parent=0
    #allocation2 [shape = 'u8[32768]{0}', space=vmem, size = 0x8000, scoped, tag = 'input window, operand 6, single buffered']
    #allocation3 [shape = 's32[1]{0}', space=sflag, size = 0x4, scoped, tag = 'scoped memory for gin_forward.1']
    #allocation4 [shape = 's32[1]{0}', space=sflag, size = 0x4, scoped, tag = 'scoped memory for gin_forward.1']
    #allocation5 [shape = 'u8[32768]{0}', space=vmem, size = 0x8000, scoped, tag = 'input window, operand 7, single buffered']
    #allocation6 [shape = 's32[1]{0}', space=sflag, size = 0x4, scoped, tag = 'scoped memory for gin_forward.1']
    #allocation7 [shape = 'u8[32768]{0}', space=vmem, size = 0x8000, scoped, tag = 'input window, operand 8, single buffered']
    #allocation8 [shape = 'u8[32768]{0}', space=vmem, size = 0x8000, scoped, tag = 'input window, operand 9, single buffered']
    #allocation9 [shape = 's32[1]{0}', space=sflag, size = 0x4, scoped, tag = 'scoped memory for gin_forward.1']
    #allocation10 [shape = 'u8[32768]{0}', space=vmem, size = 0x8000, scoped, tag = 'input window, operand 10, single buffered']
    #allocation11 [shape = 'u8[32768]{0}', space=vmem, size = 0x8000, scoped, tag = 'input window, operand 11, single buffered']
    #allocation12 [shape = 's32[1]{0}', space=sflag, size = 0x4, scoped, tag = 'scoped memory for gin_forward.1']
    #allocation13 [shape = 'u8[32768]{0}', space=vmem, size = 0x8000, scoped, tag = 'input window, operand 12, single buffered']
    #allocation14 [shape = 'u8[1024]{0}', space=vmem, size = 0x400, scoped, tag = 'output window, operand 0, single buffered']
    %19 = vsyncpa [#allocation3], 0
    %20 = vsyncpa [#allocation6], 0
    %21 = vsyncpa [#allocation9], 0
    %22 = vsyncpa [#allocation12], 0
    %23 = vsyncpa [#allocation4], 0
    // Predicated region
    $region2: #{gin_forward.1} parent=1 // pred_check
      _
    $region3: #{gin_forward.1} parent=1 // pred_check_branch
      %25 = sbr.rel (0) target = $region5
    $region4: #{gin_forward.1} parent=1 // pred_region
      _
    $region5: #{gin_forward.1} parent=1 // pred_fallthru
      _
    // Predicated region
    $region6: #{gin_forward.1} parent=1 // pred_check
      _
    $region7: #{gin_forward.1} parent=1 // pred_check_branch
      %27 = sbr.rel (0) target = $region9
    $region8: #{gin_forward.1} parent=1 // pred_region
      _
    $region9: #{gin_forward.1} parent=1 // pred_fallthru
      _
    // Predicated region
    $region10: #{gin_forward.1} parent=1 // pred_check
      _
    $region11: #{gin_forward.1} parent=1 // pred_check_branch
      %29 = sbr.rel (0) target = $region13
    $region12: #{gin_forward.1} parent=1 // pred_region
      _
    $region13: #{gin_forward.1} parent=1 // pred_fallthru
      _
    // Predicated region
    $region14: #{gin_forward.1} parent=1 // pred_check
      _
    $region15: #{gin_forward.1} parent=1 // pred_check_branch
      %31 = sbr.rel (0) target = $region17
    $region16: #{gin_forward.1} parent=1 // pred_region
      _
    $region17: #{gin_forward.1} parent=1 // pred_fallthru
      _
    // Predicated region
    $region18: #{gin_forward.1} parent=1 // pred_check
      _
    $region19: #{gin_forward.1} parent=1 // pred_check_branch
      %33 = sbr.rel (0) target = $region21
    $region20: #{gin_forward.1} parent=1 // pred_region
      _
    $region21: #{gin_forward.1} parent=1 // pred_fallthru
      _
    // Predicated region
    $region22: #{gin_forward.1} parent=1 // pred_check
      _
    $region23: #{gin_forward.1} parent=1 // pred_check_branch
      %35 = sbr.rel (0) target = $region25
    $region24: #{gin_forward.1} parent=1 // pred_region
      _
    $region25: #{gin_forward.1} parent=1 // pred_fallthru
      _
    // Predicated region
    $region26: #{gin_forward.1} parent=1 // pred_check
      _
    $region27: #{gin_forward.1} parent=1 // pred_check_branch
      %37 = sbr.rel (0) target = $region29
    $region28: #{gin_forward.1} parent=1 // pred_region
      %39 = vsyncadd [#allocation3], 0
      %s40 = sshll.u32 %s6, 4
      %s41 = int_to_ptr.hbm [resolvable:$true] %s40
      %s42 = sshll.u32 [#allocation2], 4
      %s43 = int_to_ptr.vmem [resolvable:$true] %s42
      %48 = dma.hbm_to_vmem [thread:$0]  %s41, 1024, %s43, [#allocation3], 128, 128, 8
    $region29: #{gin_forward.1} parent=1 // pred_fallthru
      _
    // Predicated region
    $region30: #{gin_forward.1} parent=1 // pred_check
      _
    $region31: #{gin_forward.1} parent=1 // pred_check_branch
      %50 = sbr.rel (0) target = $region33
    $region32: #{gin_forward.1} parent=1 // pred_region
      %52 = vsyncadd [#allocation6], 0
      %s53 = sshll.u32 %s7, 4
      %s54 = int_to_ptr.hbm [resolvable:$true] %s53
      %s55 = sshll.u32 [#allocation5], 4
      %s56 = int_to_ptr.vmem [resolvable:$true] %s55
      %61 = dma.hbm_to_vmem [thread:$0]  %s54, 1024, %s56, [#allocation6], 128, 128, 8
    $region33: #{gin_forward.1} parent=1 // pred_fallthru
      _
    // Predicated region
    $region34: #{gin_forward.1} parent=1 // pred_check
      _
    $region35: #{gin_forward.1} parent=1 // pred_check_branch
      %63 = sbr.rel (0) target = $region37
    $region36: #{gin_forward.1} parent=1 // pred_region
      %65 = vsyncadd [#allocation6], 0
      %s66 = sshll.u32 %s8, 4
      %s67 = int_to_ptr.hbm [resolvable:$true] %s66
      %s68 = sshll.u32 [#allocation7], 4
      %s69 = int_to_ptr.vmem [resolvable:$true] %s68
      %74 = dma.hbm_to_vmem [thread:$0]  %s67, 1024, %s69, [#allocation6], 128, 128, 8
    $region37: #{gin_forward.1} parent=1 // pred_fallthru
      _
    // Predicated region
    $region38: #{gin_forward.1} parent=1 // pred_check
      _
    $region39: #{gin_forward.1} parent=1 // pred_check_branch
      %76 = sbr.rel (0) target = $region41
    $region40: #{gin_forward.1} parent=1 // pred_region
      %78 = vsyncadd [#allocation9], 0
      %s79 = sshll.u32 %s9, 4
      %s80 = int_to_ptr.hbm [resolvable:$true] %s79
      %s81 = sshll.u32 [#allocation8], 4
      %s82 = int_to_ptr.vmem [resolvable:$true] %s81
      %87 = dma.hbm_to_vmem [thread:$0]  %s80, 1024, %s82, [#allocation9], 128, 128, 8
    $region41: #{gin_forward.1} parent=1 // pred_fallthru
      _
    // Predicated region
    $region42: #{gin_forward.1} parent=1 // pred_check
      _
    $region43: #{gin_forward.1} parent=1 // pred_check_branch
      %89 = sbr.rel (0) target = $region45
    $region44: #{gin_forward.1} parent=1 // pred_region
      %91 = vsyncadd [#allocation9], 0
      %s92 = sshll.u32 %s10, 4
      %s93 = int_to_ptr.hbm [resolvable:$true] %s92
      %s94 = sshll.u32 [#allocation10], 4
      %s95 = int_to_ptr.vmem [resolvable:$true] %s94
      %100 = dma.hbm_to_vmem [thread:$0]  %s93, 1024, %s95, [#allocation9], 128, 128, 8
    $region45: #{gin_forward.1} parent=1 // pred_fallthru
      _
    // Predicated region
    $region46: #{gin_forward.1} parent=1 // pred_check
      _
    $region47: #{gin_forward.1} parent=1 // pred_check_branch
      %102 = sbr.rel (0) target = $region49
    $region48: #{gin_forward.1} parent=1 // pred_region
      %104 = vsyncadd [#allocation12], 0
      %s105 = sshll.u32 %s11, 4
      %s106 = int_to_ptr.hbm [resolvable:$true] %s105
      %s107 = sshll.u32 [#allocation11], 4
      %s108 = int_to_ptr.vmem [resolvable:$true] %s107
      %113 = dma.hbm_to_vmem [thread:$0]  %s106, 1024, %s108, [#allocation12], 128, 128, 8
    $region49: #{gin_forward.1} parent=1 // pred_fallthru
      _
    // Predicated region
    $region50: #{gin_forward.1} parent=1 // pred_check
      _
    $region51: #{gin_forward.1} parent=1 // pred_check_branch
      %115 = sbr.rel (0) target = $region53
    $region52: #{gin_forward.1} parent=1 // pred_region
      %117 = vsyncadd [#allocation12], 0
      %s118 = sshll.u32 %s12, 4
      %s119 = int_to_ptr.hbm [resolvable:$true] %s118
      %s120 = sshll.u32 [#allocation13], 4
      %s121 = int_to_ptr.vmem [resolvable:$true] %s120
      %126 = dma.hbm_to_vmem [thread:$0]  %s119, 1024, %s121, [#allocation12], 128, 128, 8
    $region53: #{gin_forward.1} parent=1 // pred_fallthru
      _
    // Predicated region
    $region54: #{gin_forward.1} parent=1 // pred_check
      _
    $region55: #{gin_forward.1} parent=1 // pred_check_branch
      %128 = sbr.rel (0) target = $region57
    $region56: #{gin_forward.1} parent=1 // pred_region
      _
    $region57: #{gin_forward.1} parent=1 // pred_fallthru
      _
    // Predicated region
    $region58: #{gin_forward.1} parent=1 // pred_check
      _
    $region59: #{gin_forward.1} parent=1 // pred_check_branch
      %130 = sbr.rel (0) target = $region61
    $region60: #{gin_forward.1} parent=1 // pred_region
      %132 = dma.done [#allocation3], 1024
    $region61: #{gin_forward.1} parent=1 // pred_fallthru
      _
    // Predicated region
    $region62: #{gin_forward.1} parent=1 // pred_check
      _
    $region63: #{gin_forward.1} parent=1 // pred_check_branch
      %134 = sbr.rel (0) target = $region65
    $region64: #{gin_forward.1} parent=1 // pred_region
      %136 = dma.done [#allocation6], 1024
    $region65: #{gin_forward.1} parent=1 // pred_fallthru
      _
    // Predicated region
    $region66: #{gin_forward.1} parent=1 // pred_check
      _
    $region67: #{gin_forward.1} parent=1 // pred_check_branch
      %138 = sbr.rel (0) target = $region69
    $region68: #{gin_forward.1} parent=1 // pred_region
      %140 = dma.done [#allocation6], 1024
    $region69: #{gin_forward.1} parent=1 // pred_fallthru
      _
    // Predicated region
    $region70: #{gin_forward.1} parent=1 // pred_check
      _
    $region71: #{gin_forward.1} parent=1 // pred_check_branch
      %142 = sbr.rel (0) target = $region73
    $region72: #{gin_forward.1} parent=1 // pred_region
      %144 = dma.done [#allocation9], 1024
    $region73: #{gin_forward.1} parent=1 // pred_fallthru
      _
    // Predicated region
    $region74: #{gin_forward.1} parent=1 // pred_check
      _
    $region75: #{gin_forward.1} parent=1 // pred_check_branch
      %146 = sbr.rel (0) target = $region77
    $region76: #{gin_forward.1} parent=1 // pred_region
      %148 = dma.done [#allocation9], 1024
    $region77: #{gin_forward.1} parent=1 // pred_fallthru
      _
    // Predicated region
    $region78: #{gin_forward.1} parent=1 // pred_check
      _
    $region79: #{gin_forward.1} parent=1 // pred_check_branch
      %150 = sbr.rel (0) target = $region81
    $region80: #{gin_forward.1} parent=1 // pred_region
      %152 = dma.done [#allocation12], 1024
    $region81: #{gin_forward.1} parent=1 // pred_fallthru
      _
    // Predicated region
    $region82: #{gin_forward.1} parent=1 // pred_check
      _
    $region83: #{gin_forward.1} parent=1 // pred_check_branch
      %154 = sbr.rel (0) target = $region85
    $region84: #{gin_forward.1} parent=1 // pred_region
      %156 = dma.done [#allocation12], 1024
    $region85: #{gin_forward.1} parent=1 // pred_fallthru
      _
    %v158 = vld [vmem:[%s0] sm:$0xff]
    %v159 = vld [vmem:[%s0 + $0x8] sm:$0xff]
    %v160 = vld [vmem:[%s0 + $0x10] sm:$0xff]
    %v161 = vld [vmem:[%s0 + $0x18] sm:$0xff]
    %v162 = vld [vmem:[%s1] sm:$0xf]
    %v163 = vld [vmem:[%s1 + $0x4] sm:$0xf]
    %v164 = vld [vmem:[%s1 + $0x8] sm:$0xf]
    %v165 = vld [vmem:[%s1 + $0xc] sm:$0xf]
    %v166 = vld [vmem:[%s2] sm:$0x1]
    %v167 = vld [vmem:[%s3] sm:$0xff]
    %v168 = vpack.c.bf16 %v159, %v158
    %v169 = vpack.c.bf16 %v161, %v160
    %v174 = vunpack.c.l.b16 %v162
    %v175 = vunpack.c.l.b16 %v163
    %v176 = vunpack.c.l.b16 %v164
    %v177 = vunpack.c.l.b16 %v165
    %v178 = vpack.c.b16 %v175, %v174
    %v179 = vpack.c.b16 %v177, %v176
    %vm180 = vcmask 261120
    %v182 = vsel %vm180, %v178, 0
    %v185 = vsel %vm180, %v179, 0
    %187 = vmatpush.bf16.msra.mxu0 0
    %188 = vmatpush.bf16.msra.mxu0 0
    %189 = vmatpush.bf16.msra.mxu0 0
    %190 = vmatpush.bf16.msra.mxu0 0
    %191 = vmatpush.bf16.msra.mxu0 0
    %192 = vmatpush.bf16.msra.mxu0 0
    %193 = vmatpush.bf16.msra.mxu0 %v169
    %194 = vmatpush.bf16.msra.mxu0 %v168
    %195 = vmatmul.bf16.gmra.mxu0 %v182
    %v196 = vpop.f32.mrf.mxu0
    %v197 = vadd.f32 0.0, %v196
    %v198 = vpop.f32.mrf.mxu0
    %v199 = vadd.f32 0.0, %v198
    %200 = vmatmul.bf16.gmra.mxu0 %v185
    %v201 = vpop.f32.mrf.mxu0
    %v202 = vadd.f32 0.0, %v201
    %v203 = vpop.f32.mrf.mxu0
    %v204 = vadd.f32 0.0, %v203
    %205 = vdwg.mxu0
    %v206 = vld [vmem:[%s4] sm:$0xff]
    %v207 = vld [vmem:[%s4 + $0x8] sm:$0xff]
    %v208 = vperm.slane %v167, 0
    %vm209 = vcmask 130048
    %v211 = vsel %vm209, %v197, 0
    %v214 = vsel %vm209, %v199, 0
    %v217 = vsel %vm209, %v202, 0
    %v220 = vsel %vm209, %v204, 0
    %222 = vmatpush.msra.mxu0 0.0
    %223 = vmatpush.msra.mxu0 0.0
    %224 = vmatpush.msra.mxu0 0.0
    %225 = vmatpush.msra.mxu0 0.0
    %226 = vmatpush.msra.mxu0 0.0
    %227 = vmatpush.msra.mxu0 0.0
    %228 = vmatpush.msra.mxu0 0.0
    %229 = vmatpush.msra.mxu0 0.0
    %230 = vmatpush.msra.mxu0 0.0
    %231 = vmatpush.msra.mxu0 0.0
    %232 = vmatpush.msra.mxu0 0.0
    %233 = vmatpush.msra.mxu0 0.0
    %234 = vmatpush.msra.mxu0 0.0
    %235 = vmatpush.msra.mxu0 0.0
    %236 = vmatpush.msra.mxu0 %v207
    %237 = vmatpush.msra.mxu0 %v206
    %238 = vmatmul.f32.gmra.mxu0 %v211
    %v239 = vpop.f32.mrf.mxu0
    %v240 = vadd.f32 %v208, %v239
    %241 = vmatmul.f32.gmra.mxu0 %v214
    %v242 = vpop.f32.mrf.mxu0
    %v243 = vadd.f32 %v208, %v242
    %244 = vmatmul.f32.gmra.mxu0 %v217
    %v245 = vpop.f32.mrf.mxu0
    %v246 = vadd.f32 %v208, %v245
    %247 = vmatmul.f32.gmra.mxu0 %v220
    %v248 = vpop.f32.mrf.mxu0
    %v249 = vadd.f32 %v208, %v248
    %250 = vdwg.mxu0
    %v251 = vmax.f32 %v240, 0.0
    %v252 = vmax.f32 %v243, 0.0
    %v253 = vmax.f32 %v246, 0.0
    %v254 = vmax.f32 %v249, 0.0
    %v255 = vld [vmem:[%s5] sm:$0xff]
    %v256 = vld [vmem:[%s5 + $0x8] sm:$0xff]
    %v257 = vld [vmem:[%s5 + $0x10] sm:$0xff]
    %v258 = vld [vmem:[%s5 + $0x18] sm:$0xff]
    %v259 = vld [vmem:[%s5 + $0x20] sm:$0xff]
    %v260 = vld [vmem:[%s5 + $0x28] sm:$0xff]
    %v261 = vld [vmem:[%s5 + $0x30] sm:$0xff]
    %v262 = vld [vmem:[%s5 + $0x38] sm:$0xff]
    %v263 = vperm.slane %v167, 1
    %vm264 = vcmask 523264
    %v266 = vsel %vm264, %v251, 0
    %v269 = vsel %vm264, %v252, 0
    %v272 = vsel %vm264, %v253, 0
    %v275 = vsel %vm264, %v254, 0
    %277 = vmatpush.msra.mxu0 0.0
    %278 = vmatpush.msra.mxu0 0.0
    %279 = vmatpush.msra.mxu0 0.0
    %280 = vmatpush.msra.mxu0 0.0
    %281 = vmatpush.msra.mxu0 0.0
    %282 = vmatpush.msra.mxu0 0.0
    %283 = vmatpush.msra.mxu0 0.0
    %284 = vmatpush.msra.mxu0 0.0
    %285 = vmatpush.msra.mxu0 %v262
    %286 = vmatpush.msra.mxu0 %v261
    %287 = vmatpush.msra.mxu0 %v260
    %288 = vmatpush.msra.mxu0 %v259
    %289 = vmatpush.msra.mxu0 %v258
    %290 = vmatpush.msra.mxu0 %v257
    %291 = vmatpush.msra.mxu0 %v256
    %292 = vmatpush.msra.mxu0 %v255
    %293 = vmatmul.f32.gmra.mxu0 %v266
    %v294 = vpop.f32.mrf.mxu0
    %v295 = vadd.f32 %v263, %v294
    %296 = vmatmul.f32.gmra.mxu0 %v269
    %v297 = vpop.f32.mrf.mxu0
    %v298 = vadd.f32 %v263, %v297
    %299 = vmatmul.f32.gmra.mxu0 %v272
    %v300 = vpop.f32.mrf.mxu0
    %v301 = vadd.f32 %v263, %v300
    %302 = vmatmul.f32.gmra.mxu0 %v275
    %v303 = vpop.f32.mrf.mxu0
    %v304 = vadd.f32 %v263, %v303
    %305 = vdwg.mxu0
    %v306 = vmax.f32 %v295, 0.0
    %v307 = vmax.f32 %v298, 0.0
    %v308 = vmax.f32 %v301, 0.0
    %v309 = vmax.f32 %v304, 0.0
    %v310 = vpack.c.bf16 %v307, %v306
    %v311 = vpack.c.bf16 %v309, %v308
    %v313 = vsel %vm180, %v166, 0
    %315 = vmatpush.bf16.msra.mxu0 0
    %316 = vmatpush.bf16.msra.mxu0 0
    %317 = vmatpush.bf16.msra.mxu0 0
    %318 = vmatpush.bf16.msra.mxu0 0
    %319 = vmatpush.bf16.msra.mxu0 0
    %320 = vmatpush.bf16.msra.mxu0 0
    %321 = vmatpush.bf16.msra.mxu0 %v311
    %322 = vmatpush.bf16.msra.mxu0 %v310
    %323 = vmatmul.bf16.gmra.mxu0 %v313
    %v324 = vpop.f32.mrf.mxu0
    %v325 = vadd.f32 0.0, %v324
    %v326 = vpop.f32.mrf.mxu0
    %327 = vdwg.mxu0
    %328 = vmatpush.bf16.msra.mxu0 0
    %329 = vmatpush.bf16.msra.mxu0 0
    %330 = vmatpush.bf16.msra.mxu0 0
    %331 = vmatpush.bf16.msra.mxu0 0
    %332 = vmatpush.bf16.msra.mxu0 0
    %333 = vmatpush.bf16.msra.mxu0 0
    %334 = vmatpush.bf16.msra.mxu0 %v311
    %335 = vmatpush.bf16.msra.mxu0 %v310
    %336 = vmatmul.bf16.gmra.mxu0 %v182
    %v337 = vpop.f32.mrf.mxu0
    %v338 = vadd.f32 0.0, %v337
    %v339 = vpop.f32.mrf.mxu0
    %v340 = vadd.f32 0.0, %v339
    %341 = vmatmul.bf16.gmra.mxu0 %v185
    %v342 = vpop.f32.mrf.mxu0
    %v343 = vadd.f32 0.0, %v342
    %v344 = vpop.f32.mrf.mxu0
    %v345 = vadd.f32 0.0, %v344
    %346 = vdwg.mxu0
    %v347 = vld [vmem:[#allocation2] sm:$0xff]
    %v348 = vld [vmem:[#allocation2 + $0x8] sm:$0xff]
    %v349 = vld [vmem:[#allocation2 + $0x10] sm:$0xff]
    %v350 = vld [vmem:[#allocation2 + $0x18] sm:$0xff]
    %v351 = vld [vmem:[#allocation2 + $0x20] sm:$0xff]
    %v352 = vld [vmem:[#allocation2 + $0x28] sm:$0xff]
    %v353 = vld [vmem:[#allocation2 + $0x30] sm:$0xff]
    %v354 = vld [vmem:[#allocation2 + $0x38] sm:$0xff]
    %v355 = vperm.slane %v167, 2
    %v357 = vsel %vm264, %v338, 0
    %v360 = vsel %vm264, %v340, 0
    %v363 = vsel %vm264, %v343, 0
    %v366 = vsel %vm264, %v345, 0
    %368 = vmatpush.msra.mxu0 0.0
    %369 = vmatpush.msra.mxu0 0.0
    %370 = vmatpush.msra.mxu0 0.0
    %371 = vmatpush.msra.mxu0 0.0
    %372 = vmatpush.msra.mxu0 0.0
    %373 = vmatpush.msra.mxu0 0.0
    %374 = vmatpush.msra.mxu0 0.0
    %375 = vmatpush.msra.mxu0 0.0
    %376 = vmatpush.msra.mxu0 %v354
    %377 = vmatpush.msra.mxu0 %v353
    %378 = vmatpush.msra.mxu0 %v352
    %379 = vmatpush.msra.mxu0 %v351
    %380 = vmatpush.msra.mxu0 %v350
    %381 = vmatpush.msra.mxu0 %v349
    %382 = vmatpush.msra.mxu0 %v348
    %383 = vmatpush.msra.mxu0 %v347
    %384 = vmatmul.f32.gmra.mxu0 %v357
    %v385 = vpop.f32.mrf.mxu0
    %v386 = vadd.f32 %v355, %v385
    %387 = vmatmul.f32.gmra.mxu0 %v360
    %v388 = vpop.f32.mrf.mxu0
    %v389 = vadd.f32 %v355, %v388
    %390 = vmatmul.f32.gmra.mxu0 %v363
    %v391 = vpop.f32.mrf.mxu0
    %v392 = vadd.f32 %v355, %v391
    %393 = vmatmul.f32.gmra.mxu0 %v366
    %v394 = vpop.f32.mrf.mxu0
    %v395 = vadd.f32 %v355, %v394
    %396 = vdwg.mxu0
    %v397 = vmax.f32 %v386, 0.0
    %v398 = vmax.f32 %v389, 0.0
    %v399 = vmax.f32 %v392, 0.0
    %v400 = vmax.f32 %v395, 0.0
    %v401 = vld [vmem:[#allocation5] sm:$0xff]
    %v402 = vld [vmem:[#allocation5 + $0x8] sm:$0xff]
    %v403 = vld [vmem:[#allocation5 + $0x10] sm:$0xff]
    %v404 = vld [vmem:[#allocation5 + $0x18] sm:$0xff]
    %v405 = vld [vmem:[#allocation5 + $0x20] sm:$0xff]
    %v406 = vld [vmem:[#allocation5 + $0x28] sm:$0xff]
    %v407 = vld [vmem:[#allocation5 + $0x30] sm:$0xff]
    %v408 = vld [vmem:[#allocation5 + $0x38] sm:$0xff]
    %v409 = vperm.slane %v167, 3
    %v411 = vsel %vm264, %v397, 0
    %v414 = vsel %vm264, %v398, 0
    %v417 = vsel %vm264, %v399, 0
    %v420 = vsel %vm264, %v400, 0
    %422 = vmatpush.msra.mxu0 0.0
    %423 = vmatpush.msra.mxu0 0.0
    %424 = vmatpush.msra.mxu0 0.0
    %425 = vmatpush.msra.mxu0 0.0
    %426 = vmatpush.msra.mxu0 0.0
    %427 = vmatpush.msra.mxu0 0.0
    %428 = vmatpush.msra.mxu0 0.0
    %429 = vmatpush.msra.mxu0 0.0
    %430 = vmatpush.msra.mxu0 %v408
    %431 = vmatpush.msra.mxu0 %v407
    %432 = vmatpush.msra.mxu0 %v406
    %433 = vmatpush.msra.mxu0 %v405
    %434 = vmatpush.msra.mxu0 %v404
    %435 = vmatpush.msra.mxu0 %v403
    %436 = vmatpush.msra.mxu0 %v402
    %437 = vmatpush.msra.mxu0 %v401
    %438 = vmatmul.f32.gmra.mxu0 %v411
    %v439 = vpop.f32.mrf.mxu0
    %v440 = vadd.f32 %v409, %v439
    %441 = vmatmul.f32.gmra.mxu0 %v414
    %v442 = vpop.f32.mrf.mxu0
    %v443 = vadd.f32 %v409, %v442
    %444 = vmatmul.f32.gmra.mxu0 %v417
    %v445 = vpop.f32.mrf.mxu0
    %v446 = vadd.f32 %v409, %v445
    %447 = vmatmul.f32.gmra.mxu0 %v420
    %v448 = vpop.f32.mrf.mxu0
    %v449 = vadd.f32 %v409, %v448
    %450 = vdwg.mxu0
    %v451 = vmax.f32 %v440, 0.0
    %v452 = vmax.f32 %v443, 0.0
    %v453 = vmax.f32 %v446, 0.0
    %v454 = vmax.f32 %v449, 0.0
    %v455 = vpack.c.bf16 %v452, %v451
    %v456 = vpack.c.bf16 %v454, %v453
    %457 = vmatpush.bf16.msra.mxu0 0
    %458 = vmatpush.bf16.msra.mxu0 0
    %459 = vmatpush.bf16.msra.mxu0 0
    %460 = vmatpush.bf16.msra.mxu0 0
    %461 = vmatpush.bf16.msra.mxu0 0
    %462 = vmatpush.bf16.msra.mxu0 0
    %463 = vmatpush.bf16.msra.mxu0 %v456
    %464 = vmatpush.bf16.msra.mxu0 %v455
    %465 = vmatmul.bf16.gmra.mxu0 %v313
    %v466 = vpop.f32.mrf.mxu0
    %v467 = vadd.f32 0.0, %v466
    %v468 = vpop.f32.mrf.mxu0
    %469 = vdwg.mxu0
    %470 = vmatpush.bf16.msra.mxu0 0
    %471 = vmatpush.bf16.msra.mxu0 0
    %472 = vmatpush.bf16.msra.mxu0 0
    %473 = vmatpush.bf16.msra.mxu0 0
    %474 = vmatpush.bf16.msra.mxu0 0
    %475 = vmatpush.bf16.msra.mxu0 0
    %476 = vmatpush.bf16.msra.mxu0 %v456
    %477 = vmatpush.bf16.msra.mxu0 %v455
    %478 = vmatmul.bf16.gmra.mxu0 %v182
    %v479 = vpop.f32.mrf.mxu0
    %v480 = vadd.f32 0.0, %v479
    %v481 = vpop.f32.mrf.mxu0
    %v482 = vadd.f32 0.0, %v481
    %483 = vmatmul.bf16.gmra.mxu0 %v185
    %v484 = vpop.f32.mrf.mxu0
    %v485 = vadd.f32 0.0, %v484
    %v486 = vpop.f32.mrf.mxu0
    %v487 = vadd.f32 0.0, %v486
    %488 = vdwg.mxu0
    %v489 = vld [vmem:[#allocation7] sm:$0xff]
    %v490 = vld [vmem:[#allocation7 + $0x8] sm:$0xff]
    %v491 = vld [vmem:[#allocation7 + $0x10] sm:$0xff]
    %v492 = vld [vmem:[#allocation7 + $0x18] sm:$0xff]
    %v493 = vld [vmem:[#allocation7 + $0x20] sm:$0xff]
    %v494 = vld [vmem:[#allocation7 + $0x28] sm:$0xff]
    %v495 = vld [vmem:[#allocation7 + $0x30] sm:$0xff]
    %v496 = vld [vmem:[#allocation7 + $0x38] sm:$0xff]
    %v497 = vperm.slane %v167, 4
    %v499 = vsel %vm264, %v480, 0
    %v502 = vsel %vm264, %v482, 0
    %v505 = vsel %vm264, %v485, 0
    %v508 = vsel %vm264, %v487, 0
    %510 = vmatpush.msra.mxu0 0.0
    %511 = vmatpush.msra.mxu0 0.0
    %512 = vmatpush.msra.mxu0 0.0
    %513 = vmatpush.msra.mxu0 0.0
    %514 = vmatpush.msra.mxu0 0.0
    %515 = vmatpush.msra.mxu0 0.0
    %516 = vmatpush.msra.mxu0 0.0
    %517 = vmatpush.msra.mxu0 0.0
    %518 = vmatpush.msra.mxu0 %v496
    %519 = vmatpush.msra.mxu0 %v495
    %520 = vmatpush.msra.mxu0 %v494
    %521 = vmatpush.msra.mxu0 %v493
    %522 = vmatpush.msra.mxu0 %v492
    %523 = vmatpush.msra.mxu0 %v491
    %524 = vmatpush.msra.mxu0 %v490
    %525 = vmatpush.msra.mxu0 %v489
    %526 = vmatmul.f32.gmra.mxu0 %v499
    %v527 = vpop.f32.mrf.mxu0
    %v528 = vadd.f32 %v497, %v527
    %529 = vmatmul.f32.gmra.mxu0 %v502
    %v530 = vpop.f32.mrf.mxu0
    %v531 = vadd.f32 %v497, %v530
    %532 = vmatmul.f32.gmra.mxu0 %v505
    %v533 = vpop.f32.mrf.mxu0
    %v534 = vadd.f32 %v497, %v533
    %535 = vmatmul.f32.gmra.mxu0 %v508
    %v536 = vpop.f32.mrf.mxu0
    %v537 = vadd.f32 %v497, %v536
    %538 = vdwg.mxu0
    %v539 = vmax.f32 %v528, 0.0
    %v540 = vmax.f32 %v531, 0.0
    %v541 = vmax.f32 %v534, 0.0
    %v542 = vmax.f32 %v537, 0.0
    %v543 = vld [vmem:[#allocation8] sm:$0xff]
    %v544 = vld [vmem:[#allocation8 + $0x8] sm:$0xff]
    %v545 = vld [vmem:[#allocation8 + $0x10] sm:$0xff]
    %v546 = vld [vmem:[#allocation8 + $0x18] sm:$0xff]
    %v547 = vld [vmem:[#allocation8 + $0x20] sm:$0xff]
    %v548 = vld [vmem:[#allocation8 + $0x28] sm:$0xff]
    %v549 = vld [vmem:[#allocation8 + $0x30] sm:$0xff]
    %v550 = vld [vmem:[#allocation8 + $0x38] sm:$0xff]
    %v551 = vperm.slane %v167, 5
    %v553 = vsel %vm264, %v539, 0
    %v556 = vsel %vm264, %v540, 0
    %v559 = vsel %vm264, %v541, 0
    %v562 = vsel %vm264, %v542, 0
    %564 = vmatpush.msra.mxu0 0.0
    %565 = vmatpush.msra.mxu0 0.0
    %566 = vmatpush.msra.mxu0 0.0
    %567 = vmatpush.msra.mxu0 0.0
    %568 = vmatpush.msra.mxu0 0.0
    %569 = vmatpush.msra.mxu0 0.0
    %570 = vmatpush.msra.mxu0 0.0
    %571 = vmatpush.msra.mxu0 0.0
    %572 = vmatpush.msra.mxu0 %v550
    %573 = vmatpush.msra.mxu0 %v549
    %574 = vmatpush.msra.mxu0 %v548
    %575 = vmatpush.msra.mxu0 %v547
    %576 = vmatpush.msra.mxu0 %v546
    %577 = vmatpush.msra.mxu0 %v545
    %578 = vmatpush.msra.mxu0 %v544
    %579 = vmatpush.msra.mxu0 %v543
    %580 = vmatmul.f32.gmra.mxu0 %v553
    %v581 = vpop.f32.mrf.mxu0
    %v582 = vadd.f32 %v551, %v581
    %583 = vmatmul.f32.gmra.mxu0 %v556
    %v584 = vpop.f32.mrf.mxu0
    %v585 = vadd.f32 %v551, %v584
    %586 = vmatmul.f32.gmra.mxu0 %v559
    %v587 = vpop.f32.mrf.mxu0
    %v588 = vadd.f32 %v551, %v587
    %589 = vmatmul.f32.gmra.mxu0 %v562
    %v590 = vpop.f32.mrf.mxu0
    %v591 = vadd.f32 %v551, %v590
    %592 = vdwg.mxu0
    %v593 = vmax.f32 %v582, 0.0
    %v594 = vmax.f32 %v585, 0.0
    %v595 = vmax.f32 %v588, 0.0
    %v596 = vmax.f32 %v591, 0.0
    %v597 = vpack.c.bf16 %v594, %v593
    %v598 = vpack.c.bf16 %v596, %v595
    %599 = vmatpush.bf16.msra.mxu0 0
    %600 = vmatpush.bf16.msra.mxu0 0
    %601 = vmatpush.bf16.msra.mxu0 0
    %602 = vmatpush.bf16.msra.mxu0 0
    %603 = vmatpush.bf16.msra.mxu0 0
    %604 = vmatpush.bf16.msra.mxu0 0
    %605 = vmatpush.bf16.msra.mxu0 %v598
    %606 = vmatpush.bf16.msra.mxu0 %v597
    %607 = vmatmul.bf16.gmra.mxu0 %v313
    %v608 = vpop.f32.mrf.mxu0
    %v609 = vadd.f32 0.0, %v608
    %v610 = vpop.f32.mrf.mxu0
    %611 = vdwg.mxu0
    %v612 = vld [vmem:[#allocation10] sm:$0xff]
    %v613 = vld [vmem:[#allocation10 + $0x8] sm:$0xff]
    %v614 = vld [vmem:[#allocation10 + $0x10] sm:$0xff]
    %v615 = vld [vmem:[#allocation10 + $0x18] sm:$0xff]
    %v616 = vld [vmem:[#allocation10 + $0x20] sm:$0xff]
    %v617 = vld [vmem:[#allocation10 + $0x28] sm:$0xff]
    %v618 = vld [vmem:[#allocation10 + $0x30] sm:$0xff]
    %v619 = vld [vmem:[#allocation10 + $0x38] sm:$0xff]
    %v620 = vld [vmem:[#allocation11] sm:$0xff]
    %v621 = vld [vmem:[#allocation11 + $0x8] sm:$0xff]
    %v622 = vld [vmem:[#allocation11 + $0x10] sm:$0xff]
    %v623 = vld [vmem:[#allocation11 + $0x18] sm:$0xff]
    %v624 = vld [vmem:[#allocation11 + $0x20] sm:$0xff]
    %v625 = vld [vmem:[#allocation11 + $0x28] sm:$0xff]
    %v626 = vld [vmem:[#allocation11 + $0x30] sm:$0xff]
    %v627 = vld [vmem:[#allocation11 + $0x38] sm:$0xff]
    %v629 = vsel %vm264, %v467, 0
    %631 = vmatpush.msra.mxu0 0.0
    %632 = vmatpush.msra.mxu0 0.0
    %633 = vmatpush.msra.mxu0 0.0
    %634 = vmatpush.msra.mxu0 0.0
    %635 = vmatpush.msra.mxu0 0.0
    %636 = vmatpush.msra.mxu0 0.0
    %637 = vmatpush.msra.mxu0 0.0
    %638 = vmatpush.msra.mxu0 0.0
    %639 = vmatpush.msra.mxu0 %v627
    %640 = vmatpush.msra.mxu0 %v626
    %641 = vmatpush.msra.mxu0 %v625
    %642 = vmatpush.msra.mxu0 %v624
    %643 = vmatpush.msra.mxu0 %v623
    %644 = vmatpush.msra.mxu0 %v622
    %645 = vmatpush.msra.mxu0 %v621
    %646 = vmatpush.msra.mxu0 %v620
    %647 = vmatmul.f32.gmra.mxu0 %v629
    %v648 = vpop.f32.mrf.mxu0
    %v649 = vadd.f32 0.0, %v648
    %650 = vdwg.mxu0
    %v652 = vsel %vm264, %v325, 0
    %654 = vmatpush.msra.mxu0 0.0
    %655 = vmatpush.msra.mxu0 0.0
    %656 = vmatpush.msra.mxu0 0.0
    %657 = vmatpush.msra.mxu0 0.0
    %658 = vmatpush.msra.mxu0 0.0
    %659 = vmatpush.msra.mxu0 0.0
    %660 = vmatpush.msra.mxu0 0.0
    %661 = vmatpush.msra.mxu0 0.0
    %662 = vmatpush.msra.mxu0 %v619
    %663 = vmatpush.msra.mxu0 %v618
    %664 = vmatpush.msra.mxu0 %v617
    %665 = vmatpush.msra.mxu0 %v616
    %666 = vmatpush.msra.mxu0 %v615
    %667 = vmatpush.msra.mxu0 %v614
    %668 = vmatpush.msra.mxu0 %v613
    %669 = vmatpush.msra.mxu0 %v612
    %670 = vmatmul.f32.gmra.mxu0 %v652
    %v671 = vpop.f32.mrf.mxu0
    %v672 = vadd.f32 %v649, %v671
    %673 = vdwg.mxu0
    %v674 = vld [vmem:[#allocation13] sm:$0xff]
    %v675 = vld [vmem:[#allocation13 + $0x8] sm:$0xff]
    %v676 = vld [vmem:[#allocation13 + $0x10] sm:$0xff]
    %v677 = vld [vmem:[#allocation13 + $0x18] sm:$0xff]
    %v678 = vld [vmem:[#allocation13 + $0x20] sm:$0xff]
    %v679 = vld [vmem:[#allocation13 + $0x28] sm:$0xff]
    %v680 = vld [vmem:[#allocation13 + $0x30] sm:$0xff]
    %v681 = vld [vmem:[#allocation13 + $0x38] sm:$0xff]
    %v683 = vsel %vm264, %v609, 0
    %685 = vmatpush.msra.mxu0 0.0
    %686 = vmatpush.msra.mxu0 0.0
    %687 = vmatpush.msra.mxu0 0.0
    %688 = vmatpush.msra.mxu0 0.0
    %689 = vmatpush.msra.mxu0 0.0
    %690 = vmatpush.msra.mxu0 0.0
    %691 = vmatpush.msra.mxu0 0.0
    %692 = vmatpush.msra.mxu0 0.0
    %693 = vmatpush.msra.mxu0 %v681
    %694 = vmatpush.msra.mxu0 %v680
    %695 = vmatpush.msra.mxu0 %v679
    %696 = vmatpush.msra.mxu0 %v678
    %697 = vmatpush.msra.mxu0 %v677
    %698 = vmatpush.msra.mxu0 %v676
    %699 = vmatpush.msra.mxu0 %v675
    %700 = vmatpush.msra.mxu0 %v674
    %701 = vmatmul.f32.gmra.mxu0 %v683
    %v702 = vpop.f32.mrf.mxu0
    %v703 = vadd.f32 0.0, %v702
    %704 = vdwg.mxu0
    %v705 = vadd.f32 %v672, %v703
    %v706 = vperm.slane %v167, 6
    %v707 = vadd.f32 %v705, %v706
    %v708 = vmax.f32 %v707, 0.0
    %v709 = vld [vmem:[%s13] sm:$0xff]
    %v710 = vld [vmem:[%s13 + $0x8] sm:$0xff]
    %v711 = vld [vmem:[%s13 + $0x10] sm:$0xff]
    %v712 = vld [vmem:[%s13 + $0x18] sm:$0xff]
    %v713 = vld [vmem:[%s13 + $0x20] sm:$0xff]
    %v714 = vld [vmem:[%s13 + $0x28] sm:$0xff]
    %v715 = vld [vmem:[%s13 + $0x30] sm:$0xff]
    %v716 = vld [vmem:[%s13 + $0x38] sm:$0xff]
    %v717 = vperm.slane %v167, 7
    %v719 = vsel %vm264, %v708, 0
    %721 = vmatpush.msra.mxu0 0.0
    %722 = vmatpush.msra.mxu0 0.0
    %723 = vmatpush.msra.mxu0 0.0
    %724 = vmatpush.msra.mxu0 0.0
    %725 = vmatpush.msra.mxu0 0.0
    %726 = vmatpush.msra.mxu0 0.0
    %727 = vmatpush.msra.mxu0 0.0
    %728 = vmatpush.msra.mxu0 0.0
    %729 = vmatpush.msra.mxu0 %v716
    %730 = vmatpush.msra.mxu0 %v715
    %731 = vmatpush.msra.mxu0 %v714
    %732 = vmatpush.msra.mxu0 %v713
    %733 = vmatpush.msra.mxu0 %v712
    %734 = vmatpush.msra.mxu0 %v711
    %735 = vmatpush.msra.mxu0 %v710
    %736 = vmatpush.msra.mxu0 %v709
    %737 = vmatmul.f32.gmra.mxu0 %v719
    %v738 = vpop.f32.mrf.mxu0
    %v739 = vadd.f32 %v717, %v738
    %740 = vdwg.mxu0
    %vm741 = vcmask 9216
    %v742 = vsel %vm741, %v739, -inf
    %743 = vmax.xlane.f32.xlu0 %v742
    %v744 = vpop.xlane.xlu0 %743
    %v745 = vsub.f32 %v739, %v744
    %v746 = vmul.f32 %v745, 1.442695
    %v747 = vpow.pop %v746
    %v748 = vsel %vm741, %v747, 0.0
    %749 = vadd.xlane.f32.xlu0 %v748
    %v750 = vpop.xlane.xlu0 %749
    %v751 = vlog2.pop %v750
    %v752 = vmul.f32 %v751, 0.6931472
    %v753 = vsub.f32 %v745, %v752
    %754 = vst.msk [vmem:[#allocation14] sm:$0x3] %vm741, %v753
    // Predicated region
    $region86: #{gin_forward.1} parent=1 // pred_check
      _
    $region87: #{gin_forward.1} parent=1 // pred_check_branch
      %756 = sbr.rel (0) target = $region89
    $region88: #{gin_forward.1} parent=1 // pred_region
      %758 = vsyncadd [#allocation4], 0
      %s760 = sshll.u32 [#allocation14], 4
      %s761 = int_to_ptr.vmem [resolvable:$true] %s760
      %s762 = sshll.u32 %s14, 4
      %s763 = int_to_ptr.hbm [resolvable:$true] %s762
      %765 = dma.vmem_to_hbm [thread:$0]  %s761, 32, %s763, [#allocation4]
    $region89: #{gin_forward.1} parent=1 // pred_fallthru
      _
    // Predicated region
    $region90: #{gin_forward.1} parent=1 // pred_check
      _
    $region91: #{gin_forward.1} parent=1 // pred_check_branch
      %767 = sbr.rel (0) target = $region93
    $region92: #{gin_forward.1} parent=1 // pred_region
      %769 = dma.done [#allocation4], 32
    $region93: #{gin_forward.1} parent=1 // pred_fallthru
      _
    %770 = vsyncpa [#allocation3], 1
    %771 = vsyncpa [#allocation6], 1
    %772 = vsyncpa [#allocation9], 1
    %773 = vsyncpa [#allocation12], 1
    %774 = vsyncpa [#allocation4], 1

</llo_original>
